<compile_context>
chip_gen: v6e
topology: v6e:2x2x1
jax: 0.10.0
libtpu: 0.0.40
codegen_flags: <defaults>
</compile_context>

<pallas_src>
import math
import jax
import jax.numpy as jnp
from jax.experimental import pallas as pl
from jax.experimental.pallas import tpu as pltpu


def _embedding_kernel(lhs_ref, rhs_ref, pe_ref, ori_ref, emb_ref):
    """One fused MXU matmul for both embedding paths.

    out rows [0, M_t)  : time path  (DataEmbedding + TimeEmbedding)
    out rows [M_t, M)  : feature path (DTCEmbedding)
    ori_ref <- raw time-path rows (ori_x)
    emb_ref <- out + positional encodings (rows [0,M_t) -> xt, rest -> xs)
    """
    out = jnp.dot(lhs_ref[...], rhs_ref[...], preferred_element_type=jnp.float32)
    m_t = ori_ref.shape[0]
    ori_ref[...] = out[:m_t, :].astype(ori_ref.dtype)
    emb_ref[...] = (out + pe_ref[...]).astype(emb_ref.dtype)


def make_embedding_forward(wt_conv, ws_conv, w_time, pe_t, pe_s, batch_size,
                           out_dtype=jnp.float32):
    """One-time precompute of all x-independent slabs; returns a jitted forward.

    wt_conv: (3, F, D)   time-axis circular-conv weights (tap k <-> offset k-1)
    ws_conv: (3, W, D)   feature-axis circular-conv weights
    w_time : (T, D)      time-feature linear weights
    pe_t   : (W, D)      positional encoding added on the time path
    pe_s   : (F, D)      positional encoding added on the feature path
    """
    f32 = jnp.float32
    _, F, D = wt_conv.shape
    _, W, _ = ws_conv.shape
    T = w_time.shape[0]
    B = batch_size

    rows_t, rows_s = B * W, B * F
    K_t, K_s = 3 * F + T, 3 * W

    # Row packing so the output last dim is lane-dense (multiple of 128).
    lane = 128
    if D % lane == 0:
        p = 1
    elif lane % D == 0 and rows_t % (lane // D) == 0 and rows_s % (lane // D) == 0:
        p = lane // D
    else:
        # NOTE(perf): lane-density lost -> masked partial-lane stores (still correct).
        p = 1

    M_t, M_s = rows_t // p, rows_s // p
    M = M_t + M_s
    K_tp, K_sp = p * K_t, p * K_s
    K = K_tp + K_sp
    N = p * D

    # ----- one-time (x-independent) precompute: fused weight + PE slabs -----
    w_cat_t = jnp.concatenate([wt_conv.reshape(3 * F, D), w_time], axis=0)  # (K_t, D)
    w_cat_s = ws_conv.reshape(3 * W, D)                                     # (K_s, D)
    eye_p = jnp.eye(p, dtype=f32)
    rhs = jnp.concatenate([jnp.kron(eye_p, w_cat_t.astype(f32)),            # (K, N)
                           jnp.kron(eye_p, w_cat_s.astype(f32))], axis=0)
    pe_t_slab = jnp.tile(pe_t.astype(f32), (B, 1)).reshape(M_t, N)
    pe_s_slab = jnp.tile(pe_s.astype(f32), (B, 1)).reshape(M_s, N)
    pe_slab = jnp.concatenate([pe_t_slab, pe_s_slab], axis=0)               # (M, N)

    # Advisory cost hint: the call is tiny and latency-bound; tell XLA so.
    cost = pl.CostEstimate(
        flops=2 * M * K * N,
        transcendentals=0,
        bytes_accessed=4 * (M * K + K * N + M * N + M_t * N + M * N))

    def full_spec(shape):
        nd = len(shape)
        return pl.BlockSpec(shape, lambda i, nd=nd: (0,) * nd)

    out_shapes = (jax.ShapeDtypeStruct((M_t, N), out_dtype),   # raw time-path slab
                  jax.ShapeDtypeStruct((M, N), out_dtype))     # PE-added full slab
    in_shapes = ((M, K), (K, N), (M, N))

    fused_call = pl.pallas_call(
        _embedding_kernel,
        out_shape=out_shapes,
        grid=(1,),   # single resident step; see NOTE(v7x) above for scaling
        in_specs=[full_spec(s) for s in in_shapes],
        out_specs=tuple(full_spec(s.shape) for s in out_shapes),
        compiler_params=pltpu.CompilerParams(
            dimension_semantics=("arbitrary",)),
        cost_estimate=cost,
    )

    @jax.jit
    def forward(x, time_feat):
        # ---- only x-dependent layout plumbing (fused by XLA) ----
        # Time path: [x(+1) | x | x(-1) | time] along the contraction axis.
        cat_t = jnp.concatenate(
            [jnp.roll(x, 1, axis=1), x, jnp.roll(x, -1, axis=1), time_feat],
            axis=-1)                                            # (B, W, K_t)
        lhs_t = cat_t.reshape(M_t, K_tp)
        # Feature (DTC) path: same on the transposed input.
        xT = jnp.swapaxes(x, 1, 2)                              # (B, F, W)
        cat_s = jnp.concatenate(
            [jnp.roll(xT, 1, axis=1), xT, jnp.roll(xT, -1, axis=1)],
            axis=-1)                                            # (B, F, K_s)
        lhs_s = cat_s.reshape(M_s, K_sp)
        # Block-diagonal lhs across the two paths -> single fused MXU matmul.
        lhs = jnp.concatenate(
            [jnp.pad(lhs_t, ((0, 0), (0, K_sp))),
             jnp.pad(lhs_s, ((0, 0), (K_tp, 0)))], axis=0).astype(f32)  # (M, K)

        ori_slab, emb_slab = fused_call(lhs, rhs, pe_slab)

        # Free row-major reshapes back to the module's output layout.
        ori = ori_slab.reshape(B, W, D)
        xt = emb_slab[:M_t].reshape(B, W, D)
        xs = emb_slab[M_t:].reshape(B, F, D)
        return ori, xt, xs

    return forward


def sinusoidal_pe(length, dim):
    pos = jnp.arange(length, dtype=jnp.float32)[:, None]
    idx = jnp.arange(0, dim, 2, dtype=jnp.float32)
    div = jnp.exp(-math.log(10000.0) * idx / dim)
    pe = jnp.zeros((length, dim), jnp.float32)
    pe = pe.at[:, 0::2].set(jnp.sin(pos * div))
    pe = pe.at[:, 1::2].set(jnp.cos(pos * div))
    return pe


def forward_reference(x, time_feat, wt_conv, ws_conv, w_time, pe_t, pe_s):
    def circ_conv(inp, w):  # inp (B, L, C), w (3, C, D)
        out = 0.0
        for k in range(3):
            out = out + jnp.roll(inp, 1 - k, axis=1) @ w[k]
        return out
    ori = circ_conv(x, wt_conv) + time_feat @ w_time
    xt = ori + pe_t[None]
    xs = circ_conv(jnp.swapaxes(x, 1, 2), ws_conv) + pe_s[None]
    return ori, xt, xs


if __name__ == "__main__":
    B, W, F, D, T = 2, 16, 8, 32, 4  # batch, window_size, feature_num, model_dim, time_num

    key = jax.random.PRNGKey(0)
    kx, kt, k1, k2, k3 = jax.random.split(key, 5)

    x = jax.random.normal(kx, (B, W, F), jnp.float32)
    time_feat = jax.random.normal(kt, (B, W, T), jnp.float32)

    # Deterministic synthetic parameters (shapes implied by the module).
    wt_conv = 0.05 * jax.random.normal(k1, (3, F, D), jnp.float32)  # DataEmbedding conv
    ws_conv = 0.05 * jax.random.normal(k2, (3, W, D), jnp.float32)  # DTCEmbedding conv
    w_time = 0.05 * jax.random.normal(k3, (T, D), jnp.float32)      # TimeEmbedding linear
    pe_t = sinusoidal_pe(W, D)                                      # PositionEmbedding (time)
    pe_s = sinusoidal_pe(F, D)                                      # PositionEmbedding (feature)

    # One-time precompute (hoisted out of the per-call path).
    embedding_forward = make_embedding_forward(wt_conv, ws_conv, w_time,
                                               pe_t, pe_s, batch_size=B)

    ori_x, xt, xs = embedding_forward(x, time_feat)
    jax.block_until_ready((ori_x, xt, xs))

    ori_r, xt_r, xs_r = forward_reference(x, time_feat, wt_conv, ws_conv,
                                          w_time, pe_t, pe_s)
    assert ori_x.shape == (B, W, D) and xt.shape == (B, W, D) and xs.shape == (B, F, D)
    assert jnp.allclose(ori_x, ori_r, atol=1e-4, rtol=1e-4)
    assert jnp.allclose(xt, xt_r, atol=1e-4, rtol=1e-4)
    assert jnp.allclose(xs, xs_r, atol=1e-4, rtol=1e-4)
    print("KERNEL_OK")
</pallas_src>

<mosaic_0001>
module attributes {stable_mosaic.version = 11 : i64} {
  func.func @_embedding_kernel(%arg0: i32, %arg1: memref<12x304xf32, #tpu.memory_space<vmem>>, %arg2: memref<304x128xf32, #tpu.memory_space<vmem>>, %arg3: memref<12x128xf32, #tpu.memory_space<vmem>>, %arg4: memref<8x128xf32, #tpu.memory_space<vmem>>, %arg5: memref<12x128xf32, #tpu.memory_space<vmem>>) attributes {dimension_semantics = [#tpu.dimension_semantics<arbitrary>], iteration_bounds = array<i64: 1>, scalar_prefetch = 0 : i64, scratch_operands = 0 : i64, tpu.core_type = #tpu.core_type<tc>, window_params = [{pipeline_mode = #tpu.pipeline_mode<synchronous>, transform_indices = @transform_0, window_bounds = array<i64: 12, 304>}, {pipeline_mode = #tpu.pipeline_mode<synchronous>, transform_indices = @transform_1, window_bounds = array<i64: 304, 128>}, {pipeline_mode = #tpu.pipeline_mode<synchronous>, transform_indices = @transform_2, window_bounds = array<i64: 12, 128>}, {pipeline_mode = #tpu.pipeline_mode<synchronous>, transform_indices = @transform_3, window_bounds = array<i64: 8, 128>}, {pipeline_mode = #tpu.pipeline_mode<synchronous>, transform_indices = @transform_4, window_bounds = array<i64: 12, 128>}]} {
    %c0 = arith.constant 0 : index
    %c0_0 = arith.constant 0 : index
    %0 = vector.load %arg1[%c0, %c0_0] : memref<12x304xf32, #tpu.memory_space<vmem>>, vector<12x304xf32>
    %c0_1 = arith.constant 0 : index
    %c0_2 = arith.constant 0 : index
    %1 = vector.load %arg2[%c0_1, %c0_2] : memref<304x128xf32, #tpu.memory_space<vmem>>, vector<304x128xf32>
    %cst = arith.constant dense<0.000000e+00> : vector<12x128xf32>
    %2 = tpu.matmul %0, %1, %cst {dimension_numbers = #tpu.dot_dimension_numbers<[1], [0], [0], [1], [0, 0, 1, 1], [], []>} : vector<12x304xf32>, vector<304x128xf32>, vector<12x128xf32> -> vector<12x128xf32>
    %3 = vector.extract_strided_slice %2 {offsets = [0, 0], sizes = [8, 128], strides = [1, 1]} : vector<12x128xf32> to vector<8x128xf32>
    %c0_3 = arith.constant 0 : index
    %c0_4 = arith.constant 0 : index
    %4 = vector.load %arg4[%c0_3, %c0_4] : memref<8x128xf32, #tpu.memory_space<vmem>>, vector<8x128xf32>
    tpu.vector_store %arg4[%c0_3, %c0_4], %3 {strides = array<i32>} : memref<8x128xf32, #tpu.memory_space<vmem>>, vector<8x128xf32>,
    %c0_5 = arith.constant 0 : index
    %c0_6 = arith.constant 0 : index
    %5 = vector.load %arg3[%c0_5, %c0_6] : memref<12x128xf32, #tpu.memory_space<vmem>>, vector<12x128xf32>
    %6 = arith.addf %2, %5 : vector<12x128xf32>
    %c0_7 = arith.constant 0 : index
    %c0_8 = arith.constant 0 : index
    %7 = vector.load %arg5[%c0_7, %c0_8] : memref<12x128xf32, #tpu.memory_space<vmem>>, vector<12x128xf32>
    tpu.vector_store %arg5[%c0_7, %c0_8], %6 {strides = array<i32>} : memref<12x128xf32, #tpu.memory_space<vmem>>, vector<12x128xf32>,
    return
  }
  func.func @transform_0(%arg0: i32) -> (i32, i32) {
    %c0_i32 = arith.constant 0 : i32
    %c0_i32_0 = arith.constant 0 : i32
    %c0_i32_1 = arith.constant 0 : i32
    return %c0_i32, %c0_i32_0 : i32, i32
  }
  func.func @transform_1(%arg0: i32) -> (i32, i32) {
    %c0_i32 = arith.constant 0 : i32
    %c0_i32_0 = arith.constant 0 : i32
    %c0_i32_1 = arith.constant 0 : i32
    return %c0_i32, %c0_i32_0 : i32, i32
  }
  func.func @transform_2(%arg0: i32) -> (i32, i32) {
    %c0_i32 = arith.constant 0 : i32
    %c0_i32_0 = arith.constant 0 : i32
    %c0_i32_1 = arith.constant 0 : i32
    return %c0_i32, %c0_i32_0 : i32, i32
  }
  func.func @transform_3(%arg0: i32) -> (i32, i32) {
    %c0_i32 = arith.constant 0 : i32
    %c0_i32_0 = arith.constant 0 : i32
    %c0_i32_1 = arith.constant 0 : i32
    return %c0_i32, %c0_i32_0 : i32, i32
  }
  func.func @transform_4(%arg0: i32) -> (i32, i32) {
    %c0_i32 = arith.constant 0 : i32
    %c0_i32_0 = arith.constant 0 : i32
    %c0_i32_1 = arith.constant 0 : i32
    return %c0_i32, %c0_i32_0 : i32, i32
  }
}

</mosaic_0001>

<llo_original>
// kernel: forward.1
$region0: #{forward.1}
  #allocation0 [shape = 'u32[]', space=smem, size = 0x4, offset = 0x4, fixed_abs, tag = 'smem constant byte address 0x4 - core index']
  #allocation1 [shape = 'u32[144,128]{1,0:T(1,128)}', space=vmem, size = 0x12000, scoped, tag = 'internal scratch']
  %s0 = inlined_call_operand.vmem [shape: f32[12,304], index: 0, kind: input, shape index: {}]
  %s1 = inlined_call_operand.vmem [shape: f32[304,128], index: 1, kind: input, shape index: {}]
  %s2 = inlined_call_operand.vmem [shape: f32[12,128], index: 2, kind: input, shape index: {}]
  %s3 = inlined_call_operand.vmem [shape: f32[8,128], index: 3, kind: output, shape index: {0}]
  %s4 = inlined_call_operand.vmem [shape: f32[12,128], index: 4, kind: output, shape index: {1}]
  %5 = xla_tuple %s3, %s4
  %s6 = sld [smem:[#allocation0]]
  $region30: #{forward.1} parent=0
    _
  %s8 = ssub.s32 1, %s6
  %s9 = scalar_select 0, %s8, %s6
  // Predicated region
  $region2: #{forward.1} parent=0 // pred_check
    _
  $region3: #{forward.1} parent=0 // pred_check_branch
    %11 = sbr.rel (0) target = $region5
  $region4: #{forward.1} parent=0 // pred_region
    _
  $region5: #{forward.1} parent=0 // pred_fallthru
    _
  // Predicated region
  $region6: #{forward.1} parent=0 // pred_check
    _
  $region7: #{forward.1} parent=0 // pred_check_branch
    %13 = sbr.rel (0) target = $region9
  $region8: #{forward.1} parent=0 // pred_region
    _
  $region9: #{forward.1} parent=0 // pred_fallthru
    _
  // Predicated region
  $region10: #{forward.1} parent=0 // pred_check
    _
  $region11: #{forward.1} parent=0 // pred_check_branch
    %15 = sbr.rel (0) target = $region13
  $region12: #{forward.1} parent=0 // pred_region
    _
  $region13: #{forward.1} parent=0 // pred_fallthru
    _
  %v16 = vld [vmem:[%s0] sm:$0xff]
  %v17 = vld [vmem:[%s0 + $0x8] sm:$0xff]
  %v18 = vld [vmem:[%s0 + $0x10] sm:$0xff]
  %v19 = vld [vmem:[%s0 + $0x18] sm:$0xf]
  %v20 = vld [vmem:[%s0 + $0x20] sm:$0xf]
  %v21 = vld [vmem:[%s0 + $0x28] sm:$0xf]
  %v22 = vld [vmem:[%s1] sm:$0xff]
  %v23 = vld [vmem:[%s1 + $0x8] sm:$0xff]
  %v24 = vld [vmem:[%s1 + $0x10] sm:$0xff]
  %v25 = vld [vmem:[%s1 + $0x18] sm:$0xff]
  %v26 = vld [vmem:[%s1 + $0x20] sm:$0xff]
  %v27 = vld [vmem:[%s1 + $0x28] sm:$0xff]
  %v28 = vld [vmem:[%s1 + $0x30] sm:$0xff]
  %v29 = vld [vmem:[%s1 + $0x38] sm:$0xff]
  %v30 = vld [vmem:[%s1 + $0x40] sm:$0xff]
  %v31 = vld [vmem:[%s1 + $0x48] sm:$0xff]
  %v32 = vld [vmem:[%s1 + $0x50] sm:$0xff]
  %v33 = vld [vmem:[%s1 + $0x58] sm:$0xff]
  %v34 = vld [vmem:[%s1 + $0x60] sm:$0xff]
  %v35 = vld [vmem:[%s1 + $0x68] sm:$0xff]
  %v36 = vld [vmem:[%s1 + $0x70] sm:$0xff]
  %v37 = vld [vmem:[%s1 + $0x78] sm:$0xff]
  %v38 = vld [vmem:[%s1 + $0x80] sm:$0xff]
  %v39 = vld [vmem:[%s1 + $0x88] sm:$0xff]
  %v40 = vld [vmem:[%s1 + $0x90] sm:$0xff]
  %v41 = vld [vmem:[%s1 + $0x98] sm:$0xff]
  %v42 = vld [vmem:[%s1 + $0xa0] sm:$0xff]
  %v43 = vld [vmem:[%s1 + $0xa8] sm:$0xff]
  %v44 = vld [vmem:[%s1 + $0xb0] sm:$0xff]
  %v45 = vld [vmem:[%s1 + $0xb8] sm:$0xff]
  %v46 = vld [vmem:[%s1 + $0xc0] sm:$0xff]
  %v47 = vld [vmem:[%s1 + $0xc8] sm:$0xff]
  %v48 = vld [vmem:[%s1 + $0xd0] sm:$0xff]
  %v49 = vld [vmem:[%s1 + $0xd8] sm:$0xff]
  %v50 = vld [vmem:[%s1 + $0xe0] sm:$0xff]
  %v51 = vld [vmem:[%s1 + $0xe8] sm:$0xff]
  %v52 = vld [vmem:[%s1 + $0xf0] sm:$0xff]
  %v53 = vld [vmem:[%s1 + $0xf8] sm:$0xff]
  %v54 = vld [vmem:[%s1 + $0x100] sm:$0xff]
  %v55 = vld [vmem:[%s1 + $0x108] sm:$0xff]
  %v56 = vld [vmem:[%s1 + $0x110] sm:$0xff]
  %v57 = vld [vmem:[%s1 + $0x118] sm:$0xff]
  %v58 = vld [vmem:[%s1 + $0x120] sm:$0xff]
  %v59 = vld [vmem:[%s1 + $0x128] sm:$0xff]
  %vm60 = vcmask 392192
  %v62 = vsel %vm60, %v18, 0
  %v65 = vsel %vm60, %v21, 0
  %67 = vmatprep.subr.mxu0 0.0
  %68 = vmatpush1.msra.mxu0 %v37
  %69 = vmatprep.subr.mxu0 0.0
  %70 = vmatpush1.msra.mxu0 %v36
  %71 = vmatprep.subr.mxu0 0.0
  %72 = vmatpush1.msra.mxu0 %v35
  %73 = vmatprep.subr.mxu0 0.0
  %74 = vmatpush1.msra.mxu0 %v34
  %75 = vmatprep.subr.mxu0 0.0
  %76 = vmatpush1.msra.mxu0 %v33
  %77 = vmatprep.subr.mxu0 0.0
  %78 = vmatpush1.msra.mxu0 %v32
  %79 = vmatprep.subr.mxu0 0.0
  %80 = vmatpush1.msra.mxu0 %v31
  %81 = vmatprep.subr.mxu0 0.0
  %82 = vmatpush1.msra.mxu0 %v30
  %83 = vmatprep.subr.mxu0 0.0
  %84 = vmatpush1.msra.mxu0 %v29
  %85 = vmatprep.subr.mxu0 0.0
  %86 = vmatpush1.msra.mxu0 %v28
  %87 = vmatprep.subr.mxu0 0.0
  %88 = vmatpush1.msra.mxu0 %v27
  %89 = vmatprep.subr.mxu0 0.0
  %90 = vmatpush1.msra.mxu0 %v26
  %91 = vmatprep.subr.mxu0 0.0
  %92 = vmatpush1.msra.mxu0 %v25
  %93 = vmatprep.subr.mxu0 0.0
  %94 = vmatpush1.msra.mxu0 %v24
  %95 = vmatprep.subr.mxu0 0.0
  %96 = vmatpush1.msra.mxu0 %v23
  %97 = vmatprep.subr.mxu0 0.0
  %98 = vmatpush1.msra.mxu0 %v22
  %99 = vmatprep.subr.mxu0 0.0
  %100 = vmatpush2.msra.mxu0 %v53
  %101 = vmatprep.subr.mxu0 0.0
  %102 = vmatpush2.msra.mxu0 %v52
  %103 = vmatprep.subr.mxu0 0.0
  %104 = vmatpush2.msra.mxu0 %v51
  %105 = vmatprep.subr.mxu0 0.0
  %106 = vmatpush2.msra.mxu0 %v50
  %107 = vmatprep.subr.mxu0 0.0
  %108 = vmatpush2.msra.mxu0 %v49
  %109 = vmatprep.subr.mxu0 0.0
  %110 = vmatpush2.msra.mxu0 %v48
  %111 = vmatprep.subr.mxu0 0.0
  %112 = vmatpush2.msra.mxu0 %v47
  %113 = vmatprep.subr.mxu0 0.0
  %114 = vmatpush2.msra.mxu0 %v46
  %115 = vmatprep.subr.mxu0 0.0
  %116 = vmatpush2.msra.mxu0 %v45
  %117 = vmatprep.subr.mxu0 0.0
  %118 = vmatpush2.msra.mxu0 %v44
  %119 = vmatprep.subr.mxu0 0.0
  %120 = vmatpush2.msra.mxu0 %v43
  %121 = vmatprep.subr.mxu0 0.0
  %122 = vmatpush2.msra.mxu0 %v42
  %123 = vmatprep.subr.mxu0 0.0
  %124 = vmatpush2.msra.mxu0 %v41
  %125 = vmatprep.subr.mxu0 0.0
  %126 = vmatpush2.msra.mxu0 %v40
  %127 = vmatprep.subr.mxu0 0.0
  %128 = vmatpush2.msra.mxu0 %v39
  %129 = vmatprep.subr.mxu0 0.0
  %130 = vmatpush2.msra.mxu0 %v38
  %131 = vmatprep.mubr.f32.mxu0 %v17
  %132 = vmatmul.mubr.f32.gmra.mxu0 %v16
  %v133 = vpop.f32.mrf.mxu0
  %v134 = vadd.f32 0.0, %v133
  %v135 = vpop.f32.mrf.mxu0
  %136 = vmatprep.mubr.f32.mxu0 %v20
  %137 = vmatmul.mubr.f32.gmra.mxu0 %v19
  %v138 = vpop.f32.mrf.mxu0
  %v139 = vadd.f32 0.0, %v138
  %v140 = vpop.f32.mrf.mxu0
  %141 = vdwg.mxu0
  %142 = vmatprep.subr.mxu0 0.0
  %143 = vmatpush1.msra.mxu0 0.0
  %144 = vmatprep.subr.mxu0 0.0
  %145 = vmatpush1.msra.mxu0 0.0
  %146 = vmatprep.subr.mxu0 0.0
  %147 = vmatpush1.msra.mxu0 0.0
  %148 = vmatprep.subr.mxu0 0.0
  %149 = vmatpush1.msra.mxu0 0.0
  %150 = vmatprep.subr.mxu0 0.0
  %151 = vmatpush1.msra.mxu0 0.0
  %152 = vmatprep.subr.mxu0 0.0
  %153 = vmatpush1.msra.mxu0 0.0
  %154 = vmatprep.subr.mxu0 0.0
  %155 = vmatpush1.msra.mxu0 0.0
  %156 = vmatprep.subr.mxu0 0.0
  %157 = vmatpush1.msra.mxu0 0.0
  %158 = vmatprep.subr.mxu0 0.0
  %159 = vmatpush1.msra.mxu0 0.0
  %160 = vmatprep.subr.mxu0 0.0
  %161 = vmatpush1.msra.mxu0 0.0
  %162 = vmatprep.subr.mxu0 0.0
  %163 = vmatpush1.msra.mxu0 %v59
  %164 = vmatprep.subr.mxu0 0.0
  %165 = vmatpush1.msra.mxu0 %v58
  %166 = vmatprep.subr.mxu0 0.0
  %167 = vmatpush1.msra.mxu0 %v57
  %168 = vmatprep.subr.mxu0 0.0
  %169 = vmatpush1.msra.mxu0 %v56
  %170 = vmatprep.subr.mxu0 0.0
  %171 = vmatpush1.msra.mxu0 %v55
  %172 = vmatprep.subr.mxu0 0.0
  %173 = vmatpush1.msra.mxu0 %v54
  %174 = vmatprep.subr.mxu0 0.0
  %175 = vmatpush2.msra.mxu0 0.0
  %176 = vmatprep.subr.mxu0 0.0
  %177 = vmatpush2.msra.mxu0 0.0
  %178 = vmatprep.subr.mxu0 0.0
  %179 = vmatpush2.msra.mxu0 0.0
  %180 = vmatprep.subr.mxu0 0.0
  %181 = vmatpush2.msra.mxu0 0.0
  %182 = vmatprep.subr.mxu0 0.0
  %183 = vmatpush2.msra.mxu0 0.0
  %184 = vmatprep.subr.mxu0 0.0
  %185 = vmatpush2.msra.mxu0 0.0
  %186 = vmatprep.subr.mxu0 0.0
  %187 = vmatpush2.msra.mxu0 0.0
  %188 = vmatprep.subr.mxu0 0.0
  %189 = vmatpush2.msra.mxu0 0.0
  %190 = vmatprep.subr.mxu0 0.0
  %191 = vmatpush2.msra.mxu0 0.0
  %192 = vmatprep.subr.mxu0 0.0
  %193 = vmatpush2.msra.mxu0 0.0
  %194 = vmatprep.subr.mxu0 0.0
  %195 = vmatpush2.msra.mxu0 0.0
  %196 = vmatprep.subr.mxu0 0.0
  %197 = vmatpush2.msra.mxu0 0.0
  %198 = vmatprep.subr.mxu0 0.0
  %199 = vmatpush2.msra.mxu0 0.0
  %200 = vmatprep.subr.mxu0 0.0
  %201 = vmatpush2.msra.mxu0 0.0
  %202 = vmatprep.subr.mxu0 0.0
  %203 = vmatpush2.msra.mxu0 0.0
  %204 = vmatprep.subr.mxu0 0.0
  %205 = vmatpush2.msra.mxu0 0.0
  %206 = vmatprep.mubr.f32.mxu0 0.0
  %207 = vmatmul.mubr.f32.gmra.mxu0 %v62
  %v208 = vpop.f32.mrf.mxu0
  %v209 = vadd.f32 %v134, %v208
  %v210 = vpop.f32.mrf.mxu0
  %211 = vmatprep.mubr.f32.mxu0 0.0
  %212 = vmatmul.mubr.f32.gmra.mxu0 %v65
  %v213 = vpop.f32.mrf.mxu0
  %v214 = vadd.f32 %v139, %v213
  %v215 = vpop.f32.mrf.mxu0
  %216 = vdwg.mxu0
  %217 = vst [vmem:[%s3] sm:$0xff] %v209
  %v218 = vld [vmem:[%s2] sm:$0xff]
  %v219 = vld [vmem:[%s2 + $0x8] sm:$0xf]
  %v220 = vadd.f32 %v209, %v218
  %v221 = vadd.f32 %v214, %v219
  %222 = vst [vmem:[%s4] sm:$0xff] %v220
  %223 = vst [vmem:[%s4 + $0x8] sm:$0xf] %v221
  // Predicated region
  $region14: #{forward.1} parent=0 // pred_check
    _
  $region15: #{forward.1} parent=0 // pred_check_branch
    %225 = sbr.rel (0) target = $region17
  $region16: #{forward.1} parent=0 // pred_region
    _
  $region17: #{forward.1} parent=0 // pred_fallthru
    _
  // Predicated region
  $region18: #{forward.1} parent=0 // pred_check
    _
  $region19: #{forward.1} parent=0 // pred_check_branch
    %227 = sbr.rel (0) target = $region21
  $region20: #{forward.1} parent=0 // pred_region
    _
  $region21: #{forward.1} parent=0 // pred_fallthru
    _
  // Predicated region
  $region22: #{forward.1} parent=0 // pred_check
    _
  $region23: #{forward.1} parent=0 // pred_check_branch
    %229 = sbr.rel (0) target = $region25
  $region24: #{forward.1} parent=0 // pred_region
    _
  $region25: #{forward.1} parent=0 // pred_fallthru
    _
  // Predicated region
  $region26: #{forward.1} parent=0 // pred_check
    _
  $region27: #{forward.1} parent=0 // pred_check_branch
    %231 = sbr.rel (0) target = $region29
  $region28: #{forward.1} parent=0 // pred_region
    _
  $region29: #{forward.1} parent=0 // pred_fallthru
    _

</llo_original>
